<compile_context>
chip_gen: v7x
topology: tpu7x:2x2x1
jax: 0.10.0
libtpu: 0.0.40
codegen_flags: <defaults>
</compile_context>

<pallas_src>
import functools

import jax
import jax.numpy as jnp
from jax.experimental import pallas as pl
from jax.experimental.pallas import tpu as pltpu


def _round_up(a, b):
    return -(-a // b) * b


def _tpu_config():
    """(num_splits, max_block_rows, vmem_limit_bytes) tuned per TPU generation."""
    try:
        kind = jax.devices()[0].device_kind.lower()
    except Exception:  # pragma: no cover - defensive
        kind = ""
    mib = 1024 * 1024
    if "v7" in kind or "7x" in kind:
        # 2 TensorCores / 64 MiB physical VMEM: shard the reduction, modest tiles.
        return 2, 4096, 48 * mib
    if "v6" in kind:
        # 1 TC / 128 MiB physical VMEM / fast HBM: big tiles amortize step cost.
        return 1, 8192, 96 * mib
    if "v5" in kind:
        # v5e: 16 MiB default scoped-VMEM limit -> raise it, moderate tiles.
        return 1, 4096, 96 * mib
    # Unknown chip: conservative sizes, default scoped-VMEM limit.
    return 1, 2048, None


def _sublane_multiple(*dtypes):
    """Minimum second-to-last block-dim multiple: 8 (4B), 16 (2B), 32 (1B) dtypes."""
    m = 8
    for d in dtypes:
        m = max(m, 32 // max(1, jnp.dtype(d).itemsize))
    return m


def _bce_kernel(n_ref, x_ref, t_ref, o_ref, acc_ref, *,
                block_rows, blocks_per_split, apply_sigmoid):
    c = pl.program_id(0)   # split (parallel across TCs on v7x)
    j = pl.program_id(1)   # sequential reduction step within this split

    @pl.when(j == 0)
    def _():
        acc_ref[...] = jnp.zeros_like(acc_ref)

    x = x_ref[...].astype(jnp.float32)
    t = t_ref[...].astype(jnp.float32)

    if apply_sigmoid:
        # Fused log-sigmoid: one exp + one log per element (vs sigmoid + 2 logs).
        e = jnp.exp(-jnp.abs(x))
        l1p = jnp.log(1.0 + e)
        log_p = -(jnp.maximum(-x, 0.0) + l1p)      # log(sigmoid(x))
        log_1mp = -(jnp.maximum(x, 0.0) + l1p)     # log(1 - sigmoid(x))
    else:
        log_p = jnp.log(x)
        log_1mp = jnp.log(1.0 - x)
    # torch's binary_cross_entropy clamps each log term at -100.
    log_p = jnp.maximum(log_p, -100.0)
    log_1mp = jnp.maximum(log_1mp, -100.0)
    # Single-multiply combine of -(t*log_p + (1-t)*log_1mp).
    bce = -(log_1mp + t * (log_p - log_1mp))

    # Only the (at most one) ragged block per split pays for the mask math.
    block_elems = block_rows * 128
    block_idx = c * blocks_per_split + j           # logical (unclamped) index
    base = block_idx * block_elems
    n = n_ref[0]
    is_partial = base + block_elems > n

    @pl.when(jnp.logical_not(is_partial))
    def _():
        acc_ref[...] += jnp.sum(bce.reshape(block_rows // 8, 8, 128), axis=0)

    @pl.when(is_partial)
    def _():
        row_ids = jax.lax.broadcasted_iota(jnp.int32, (block_rows, 128), 0)
        lane_ids = jax.lax.broadcasted_iota(jnp.int32, (block_rows, 128), 1)
        valid = (base + row_ids * 128 + lane_ids) < n
        masked = jnp.where(valid, bce, 0.0)
        acc_ref[...] += jnp.sum(masked.reshape(block_rows // 8, 8, 128), axis=0)

    @pl.when(j == blocks_per_split - 1)
    def _():
        o_ref[...] = acc_ref[...][None]


def bce_loss(inputs, targets, smooth=1, use_sigmoid=True):
    """Mean binary cross entropy over all elements (PyTorch BCELoss.forward)."""
    del smooth  # unused by the reference module as well
    x = inputs.reshape(-1)
    t = targets.reshape(-1)
    n = x.shape[0]
    assert n > 0, "BCELoss of an empty tensor is undefined (division by zero)"

    num_splits, max_block_rows, vmem_limit = _tpu_config()
    sub = _sublane_multiple(x.dtype, t.dtype)

    # Pad only to the small (sub*128) granularity needed for a legal (rows, 128)
    # blocked layout; the ragged final block is masked in-kernel via n, so there
    # is no pad-to-tile copy of the full tensors for typical shapes.
    rows = _round_up(pl.cdiv(n, 128), sub)
    pad = rows * 128 - n
    if pad:
        x = jnp.pad(x, (0, pad))
        t = jnp.pad(t, (0, pad))

    block_rows = min(max_block_rows, _round_up(pl.cdiv(rows, num_splits), sub))
    nb = pl.cdiv(rows, block_rows)                  # blocks that touch data
    blocks_per_split = pl.cdiv(nb, num_splits)
    last_block = nb - 1

    x2 = x.reshape(rows, 128)   # keep input dtype; kernel upcasts to f32
    t2 = t.reshape(rows, 128)
    n_arr = jnp.array([n], dtype=jnp.int32)

    kernel = functools.partial(
        _bce_kernel, block_rows=block_rows, blocks_per_split=blocks_per_split,
        apply_sigmoid=bool(use_sigmoid))

    def idx(c, j, n_ref):
        # Clamp so the DMA stays in-bounds even for the (at most num_splits-1)
        # grid steps past the data; those steps are fully masked in-kernel.
        return (jnp.minimum(c * blocks_per_split + j, last_block), 0)

    cp_kwargs = dict(dimension_semantics=("parallel", "arbitrary"))
    if vmem_limit is not None:
        cp_kwargs["vmem_limit_bytes"] = int(vmem_limit)

    cost = pl.CostEstimate(
        flops=12 * n,
        transcendentals=2 * n,
        bytes_accessed=int(x2.nbytes) + int(t2.nbytes) + num_splits * 8 * 128 * 4,
    )

    partials = pl.pallas_call(
        kernel,
        out_shape=jax.ShapeDtypeStruct((num_splits, 8, 128), jnp.float32),
        grid_spec=pltpu.PrefetchScalarGridSpec(
            num_scalar_prefetch=1,
            grid=(num_splits, blocks_per_split),
            in_specs=[
                pl.BlockSpec((block_rows, 128), idx),
                pl.BlockSpec((block_rows, 128), idx),
            ],
            out_specs=pl.BlockSpec((1, 8, 128), lambda c, j, n_ref: (c, 0, 0)),
            scratch_shapes=[pltpu.VMEM((8, 128), jnp.float32)],
        ),
        compiler_params=pltpu.CompilerParams(**cp_kwargs),
        cost_estimate=cost,
    )(n_arr, x2, t2)

    # Single tiny final reduction + mean in the wrapper.
    return jnp.sum(partials) / jnp.float32(n)


def _bce_ref(inputs, targets, use_sigmoid=True):
    x = inputs.reshape(-1).astype(jnp.float32)
    p = jax.nn.sigmoid(x) if use_sigmoid else x
    t = targets.reshape(-1).astype(jnp.float32)
    log_p = jnp.maximum(jnp.log(p), -100.0)
    log_1mp = jnp.maximum(jnp.log(1.0 - p), -100.0)
    return jnp.mean(-(t * log_p + (1.0 - t) * log_1mp))


if __name__ == "__main__":
    key = jax.random.PRNGKey(0)
    k1, k2, k3, k4 = jax.random.split(key, 4)

    # Segmentation-style logits and binary targets, NCHW.
    x = jax.random.normal(k1, (2, 4, 16, 16), dtype=jnp.float32)
    t = (jax.random.uniform(k2, (2, 4, 16, 16)) > 0.5).astype(jnp.float32)
    loss = jax.block_until_ready(bce_loss(x, t))
    ref = _bce_ref(x, t)
    assert jnp.allclose(loss, ref, rtol=1e-5, atol=1e-5), (loss, ref)

    # Ragged size (n not a multiple of 128) exercises the masked final block.
    x2 = jax.random.normal(k3, (3, 5, 7, 11), dtype=jnp.float32)
    t2 = (jax.random.uniform(k4, (3, 5, 7, 11)) > 0.5).astype(jnp.float32)
    loss2 = jax.block_until_ready(bce_loss(x2, t2))
    ref2 = _bce_ref(x2, t2)
    assert jnp.allclose(loss2, ref2, rtol=1e-5, atol=1e-5), (loss2, ref2)

    print("KERNEL_OK")
</pallas_src>

<mosaic_0001>
module attributes {stable_mosaic.version = 11 : i64} {
  func.func @_bce_kernel(%arg0: i32, %arg1: i32, %arg2: memref<1xi32, #tpu.memory_space<smem>>, %arg3: memref<16x128xf32, #tpu.memory_space<vmem>>, %arg4: memref<16x128xf32, #tpu.memory_space<vmem>>, %arg5: memref<1x8x128xf32, #tpu.memory_space<vmem>>, %arg6: memref<8x128xf32, #tpu.memory_space<vmem>>) attributes {dimension_semantics = [#tpu.dimension_semantics<parallel>, #tpu.dimension_semantics<arbitrary>], iteration_bounds = array<i64: 1, 1>, scalar_prefetch = 1 : i64, scratch_operands = 1 : i64, tpu.core_type = #tpu.core_type<tc>, window_params = [{transform_indices = @transform_0, window_bounds = array<i64: 16, 128>}, {transform_indices = @transform_1, window_bounds = array<i64: 16, 128>}, {transform_indices = @transform_2, window_bounds = array<i64: 1, 8, 128>}]} {
    %c0_i32 = arith.constant 0 : i32
    %0 = arith.cmpi eq, %arg1, %c0_i32 : i32
    %1 = arith.extui %0 : i1 to i32
    %c0_i32_0 = arith.constant 0 : i32
    %2 = arith.cmpi ne, %1, %c0_i32_0 : i32
    scf.if %2 {
      %cst_19 = arith.constant 0.000000e+00 : f32
      %47 = vector.broadcast %cst_19 : f32 to vector<8x128xf32>
      %c0_20 = arith.constant 0 : index
      %c0_21 = arith.constant 0 : index
      %48 = vector.load %arg6[%c0_20, %c0_21] : memref<8x128xf32, #tpu.memory_space<vmem>>, vector<8x128xf32>
      tpu.vector_store %arg6[%c0_20, %c0_21], %47 {strides = array<i32>} : memref<8x128xf32, #tpu.memory_space<vmem>>, vector<8x128xf32>,
    } else {
    }
    %c0 = arith.constant 0 : index
    %c0_1 = arith.constant 0 : index
    %3 = vector.load %arg3[%c0, %c0_1] : memref<16x128xf32, #tpu.memory_space<vmem>>, vector<16x128xf32>
    %c0_2 = arith.constant 0 : index
    %c0_3 = arith.constant 0 : index
    %4 = vector.load %arg4[%c0_2, %c0_3] : memref<16x128xf32, #tpu.memory_space<vmem>>, vector<16x128xf32>
    %5 = math.absf %3 : vector<16x128xf32>
    %cst = arith.constant 0.000000e+00 : f32
    %6 = vector.broadcast %cst : f32 to vector<16x128xf32>
    %7 = arith.subf %6, %5 : vector<16x128xf32>
    %8 = math.exp %7 : vector<16x128xf32>
    %cst_4 = arith.constant 1.000000e+00 : f32
    %9 = vector.broadcast %cst_4 : f32 to vector<16x128xf32>
    %10 = arith.addf %9, %8 : vector<16x128xf32>
    %11 = math.log %10 : vector<16x128xf32>
    %cst_5 = arith.constant 0.000000e+00 : f32
    %12 = vector.broadcast %cst_5 : f32 to vector<16x128xf32>
    %13 = arith.subf %12, %3 : vector<16x128xf32>
    %cst_6 = arith.constant 0.000000e+00 : f32
    %14 = vector.broadcast %cst_6 : f32 to vector<16x128xf32>
    %15 = arith.maximumf %13, %14 : vector<16x128xf32>
    %16 = arith.addf %15, %11 : vector<16x128xf32>
    %cst_7 = arith.constant 0.000000e+00 : f32
    %17 = vector.broadcast %cst_7 : f32 to vector<16x128xf32>
    %18 = arith.subf %17, %16 : vector<16x128xf32>
    %cst_8 = arith.constant 0.000000e+00 : f32
    %19 = vector.broadcast %cst_8 : f32 to vector<16x128xf32>
    %20 = arith.maximumf %3, %19 : vector<16x128xf32>
    %21 = arith.addf %20, %11 : vector<16x128xf32>
    %cst_9 = arith.constant 0.000000e+00 : f32
    %22 = vector.broadcast %cst_9 : f32 to vector<16x128xf32>
    %23 = arith.subf %22, %21 : vector<16x128xf32>
    %cst_10 = arith.constant -1.000000e+02 : f32
    %24 = vector.broadcast %cst_10 : f32 to vector<16x128xf32>
    %25 = arith.maximumf %18, %24 : vector<16x128xf32>
    %cst_11 = arith.constant -1.000000e+02 : f32
    %26 = vector.broadcast %cst_11 : f32 to vector<16x128xf32>
    %27 = arith.maximumf %23, %26 : vector<16x128xf32>
    %28 = arith.subf %25, %27 : vector<16x128xf32>
    %29 = arith.mulf %4, %28 : vector<16x128xf32>
    %30 = arith.addf %27, %29 : vector<16x128xf32>
    %cst_12 = arith.constant 0.000000e+00 : f32
    %31 = vector.broadcast %cst_12 : f32 to vector<16x128xf32>
    %32 = arith.subf %31, %30 : vector<16x128xf32>
    %c1_i32 = arith.constant 1 : i32
    %33 = arith.muli %arg0, %c1_i32 : i32
    %34 = arith.addi %33, %arg1 : i32
    %c2048_i32 = arith.constant 2048 : i32
    %35 = arith.muli %34, %c2048_i32 : i32
    %c0_13 = arith.constant 0 : index
    %36 = memref.load %arg2[%c0_13] : memref<1xi32, #tpu.memory_space<smem>>
    %c2048_i32_14 = arith.constant 2048 : i32
    %37 = arith.addi %35, %c2048_i32_14 : i32
    %38 = arith.cmpi sgt, %37, %36 : i32
    %true = arith.constant true
    %39 = arith.xori %38, %true : i1
    %40 = arith.extui %39 : i1 to i32
    %c0_i32_15 = arith.constant 0 : i32
    %41 = arith.cmpi ne, %40, %c0_i32_15 : i32
    scf.if %41 {
      %c0_19 = arith.constant 0 : index
      %c0_20 = arith.constant 0 : index
      %47 = vector.load %arg6[%c0_19, %c0_20] : memref<8x128xf32, #tpu.memory_space<vmem>>, vector<8x128xf32>
      %48 = vector.shape_cast %32 : vector<16x128xf32> to vector<2x8x128xf32>
      %cst_21 = arith.constant dense<0.000000e+00> : vector<8x128xf32>
      %49 = vector.multi_reduction <add>, %48, %cst_21 [0] : vector<2x8x128xf32> to vector<8x128xf32>
      %50 = arith.addf %47, %49 : vector<8x128xf32>
      %c0_22 = arith.constant 0 : index
      %c0_23 = arith.constant 0 : index
      %51 = vector.load %arg6[%c0_22, %c0_23] : memref<8x128xf32, #tpu.memory_space<vmem>>, vector<8x128xf32>
      tpu.vector_store %arg6[%c0_22, %c0_23], %50 {strides = array<i32>} : memref<8x128xf32, #tpu.memory_space<vmem>>, vector<8x128xf32>,
    } else {
    }
    %42 = arith.extui %38 : i1 to i32
    %c0_i32_16 = arith.constant 0 : i32
    %43 = arith.cmpi ne, %42, %c0_i32_16 : i32
    scf.if %43 {
      %47 = tpu.iota {dimensions = array<i32: 0>} : vector<16x128xi32>
      %48 = tpu.iota {dimensions = array<i32: 1>} : vector<16x128xi32>
      %c128_i32 = arith.constant 128 : i32
      %49 = vector.broadcast %c128_i32 : i32 to vector<16x128xi32>
      %50 = arith.muli %47, %49 : vector<16x128xi32>
      %51 = vector.broadcast %35 : i32 to vector<16x128xi32>
      %52 = arith.addi %51, %50 : vector<16x128xi32>
      %53 = arith.addi %52, %48 : vector<16x128xi32>
      %54 = vector.broadcast %36 : i32 to vector<16x128xi32>
      %55 = arith.cmpi slt, %53, %54 : vector<16x128xi32>
      %cst_19 = arith.constant 0.000000e+00 : f32
      %56 = vector.broadcast %cst_19 : f32 to vector<16x128xf32>
      %57 = arith.select %55, %32, %56 : vector<16x128xi1>, vector<16x128xf32>
      %c0_20 = arith.constant 0 : index
      %c0_21 = arith.constant 0 : index
      %58 = vector.load %arg6[%c0_20, %c0_21] : memref<8x128xf32, #tpu.memory_space<vmem>>, vector<8x128xf32>
      %59 = vector.shape_cast %57 : vector<16x128xf32> to vector<2x8x128xf32>
      %cst_22 = arith.constant dense<0.000000e+00> : vector<8x128xf32>
      %60 = vector.multi_reduction <add>, %59, %cst_22 [0] : vector<2x8x128xf32> to vector<8x128xf32>
      %61 = arith.addf %58, %60 : vector<8x128xf32>
      %c0_23 = arith.constant 0 : index
      %c0_24 = arith.constant 0 : index
      %62 = vector.load %arg6[%c0_23, %c0_24] : memref<8x128xf32, #tpu.memory_space<vmem>>, vector<8x128xf32>
      tpu.vector_store %arg6[%c0_23, %c0_24], %61 {strides = array<i32>} : memref<8x128xf32, #tpu.memory_space<vmem>>, vector<8x128xf32>,
    } else {
    }
    %c0_i32_17 = arith.constant 0 : i32
    %44 = arith.cmpi eq, %arg1, %c0_i32_17 : i32
    %45 = arith.extui %44 : i1 to i32
    %c0_i32_18 = arith.constant 0 : i32
    %46 = arith.cmpi ne, %45, %c0_i32_18 : i32
    scf.if %46 {
      %c0_19 = arith.constant 0 : index
      %c0_20 = arith.constant 0 : index
      %47 = vector.load %arg6[%c0_19, %c0_20] : memref<8x128xf32, #tpu.memory_space<vmem>>, vector<8x128xf32>
      %48 = vector.shape_cast %47 : vector<8x128xf32> to vector<1x8x128xf32>
      %c0_21 = arith.constant 0 : index
      %c0_22 = arith.constant 0 : index
      %c0_23 = arith.constant 0 : index
      %49 = vector.load %arg5[%c0_21, %c0_22, %c0_23] : memref<1x8x128xf32, #tpu.memory_space<vmem>>, vector<1x8x128xf32>
      tpu.vector_store %arg5[%c0_21, %c0_22, %c0_23], %48 {strides = array<i32>} : memref<1x8x128xf32, #tpu.memory_space<vmem>>, vector<1x8x128xf32>,
    } else {
    }
    return
  }
  func.func @transform_0(%arg0: i32, %arg1: i32, %arg2: memref<1xi32, #tpu.memory_space<smem>>) -> (i32, i32) {
    %c1_i32 = arith.constant 1 : i32
    %0 = arith.muli %arg0, %c1_i32 : i32
    %1 = arith.addi %0, %arg1 : i32
    %c0_i32 = arith.constant 0 : i32
    %2 = arith.minsi %1, %c0_i32 : i32
    %c0_i32_0 = arith.constant 0 : i32
    %c0_i32_1 = arith.constant 0 : i32
    return %2, %c0_i32_0 : i32, i32
  }
  func.func @transform_1(%arg0: i32, %arg1: i32, %arg2: memref<1xi32, #tpu.memory_space<smem>>) -> (i32, i32) {
    %c1_i32 = arith.constant 1 : i32
    %0 = arith.muli %arg0, %c1_i32 : i32
    %1 = arith.addi %0, %arg1 : i32
    %c0_i32 = arith.constant 0 : i32
    %2 = arith.minsi %1, %c0_i32 : i32
    %c0_i32_0 = arith.constant 0 : i32
    %c0_i32_1 = arith.constant 0 : i32
    return %2, %c0_i32_0 : i32, i32
  }
  func.func @transform_2(%arg0: i32, %arg1: i32, %arg2: memref<1xi32, #tpu.memory_space<smem>>) -> (i32, i32, i32) {
    %c0_i32 = arith.constant 0 : i32
    %c0_i32_0 = arith.constant 0 : i32
    %c0_i32_1 = arith.constant 0 : i32
    return %arg0, %c0_i32, %c0_i32_0 : i32, i32, i32
  }
}

</mosaic_0001>

<llo_original>
// kernel: tpu_custom_call.1
$region0: #{tpu_custom_call.1}
  #allocation0 [shape = 'u32[]', space=smem, size = 0x4, offset = 0x4, fixed_abs, tag = 'smem constant byte address 0x4 - core index']
  #allocation1 [shape = 'u32[144,128]{1,0:T(1,128)}', space=vmem, size = 0x12000, scoped, tag = 'internal scratch']
  #allocation2 [shape = 'f32[8,128]{1,0:T(8,128)}', space=vmem, size = 0x1000, scoped, tag = 'scratch operand']
  #allocation3 [shape = 's32[1]{0}', space=sflag, size = 0x4, scoped, tag = 'scoped memory for tpu_custom_call.1']
  #allocation4 [shape = 's32[1]{0:T(128)S(6)}', space=smem, size = 0x200, scoped, tag = 'prefetched SMEM operand 0']
  %s0 = inlined_call_operand.<no memory space> [shape: s32[1], index: 0, kind: input, shape index: {}]
  %s1 = inlined_call_operand.hbm [shape: f32[16,128], index: 1, kind: input, shape index: {}]
  %s2 = inlined_call_operand.hbm [shape: f32[16,128], index: 2, kind: input, shape index: {}]
  %s3 = inlined_call_operand.hbm [shape: f32[1,8,128], index: 3, kind: output, shape index: {}]
  %s4 = sld [smem:[#allocation0]]
  $region42: #{tpu_custom_call.1} parent=0
    _
  %s6 = ssub.s32 1, %s4
  %s7 = scalar_select 0, %s6, %s4
  %8 = sst [smem:[#allocation4]] %s0
  $region1: #{tpu_custom_call.1} parent=0
    #allocation5 [shape = 'u8[8192]{0}', space=vmem, size = 0x2000, scoped, tag = 'input window, operand 1, single buffered']
    #allocation6 [shape = 's32[1]{0}', space=sflag, size = 0x4, scoped, tag = 'scoped memory for tpu_custom_call.1']
    #allocation7 [shape = 's32[1]{0}', space=sflag, size = 0x4, scoped, tag = 'scoped memory for tpu_custom_call.1']
    #allocation8 [shape = 'u8[8192]{0}', space=vmem, size = 0x2000, scoped, tag = 'input window, operand 2, single buffered']
    #allocation9 [shape = 's32[1]{0}', space=sflag, size = 0x4, scoped, tag = 'scoped memory for tpu_custom_call.1']
    #allocation10 [shape = 'u8[4096]{0}', space=vmem, size = 0x1000, scoped, tag = 'output window, operand 0, single buffered']
    %9 = vsyncpa [#allocation6], 0
    %10 = vsyncpa [#allocation9], 0
    %11 = vsyncpa [#allocation7], 0
    // Predicated region
    $region2: #{tpu_custom_call.1} parent=1 // pred_check
      _
    $region3: #{tpu_custom_call.1} parent=1 // pred_check_branch
      %13 = sbr.rel (0) target = $region5
    $region4: #{tpu_custom_call.1} parent=1 // pred_region
      %s14 = sadd.s32 0, 0
      %p15 = scmp.lt.s32.totalorder %s14, 0
      %s16 = scalar_select %p15, %s14, 0
      %s17 = smul.u32 2, %s16
      %s19 = ssub.s32 256, 256
      %20 = vsyncadd [#allocation6], %s19
      %s21 = smul.addr %s17, 128
      %s22 = scalar_lea.hbm %s1, %s21
      %s23 = sshll.u32 [#allocation5], 4
      %s24 = int_to_ptr.vmem [resolvable:$true] %s23
      %29 = dma.hbm_to_vmem [thread:$0]  %s22, 256, %s24, [#allocation6], 128, 128, 8
    $region5: #{tpu_custom_call.1} parent=1 // pred_fallthru
      _
    // Predicated region
    $region6: #{tpu_custom_call.1} parent=1 // pred_check
      _
    $region7: #{tpu_custom_call.1} parent=1 // pred_check_branch
      %31 = sbr.rel (0) target = $region9
    $region8: #{tpu_custom_call.1} parent=1 // pred_region
      %s32 = sadd.s32 0, 0
      %p33 = scmp.lt.s32.totalorder %s32, 0
      %s34 = scalar_select %p33, %s32, 0
      %s35 = smul.u32 2, %s34
      %s37 = ssub.s32 256, 256
      %38 = vsyncadd [#allocation9], %s37
      %s39 = smul.addr %s35, 128
      %s40 = scalar_lea.hbm %s2, %s39
      %s41 = sshll.u32 [#allocation8], 4
      %s42 = int_to_ptr.vmem [resolvable:$true] %s41
      %47 = dma.hbm_to_vmem [thread:$0]  %s40, 256, %s42, [#allocation9], 128, 128, 8
    $region9: #{tpu_custom_call.1} parent=1 // pred_fallthru
      _
    // Predicated region
    $region10: #{tpu_custom_call.1} parent=1 // pred_check
      _
    $region11: #{tpu_custom_call.1} parent=1 // pred_check_branch
      %49 = sbr.rel (0) target = $region13
    $region12: #{tpu_custom_call.1} parent=1 // pred_region
      %50 = dma.done [#allocation6], 256
    $region13: #{tpu_custom_call.1} parent=1 // pred_fallthru
      _
    // Predicated region
    $region14: #{tpu_custom_call.1} parent=1 // pred_check
      _
    $region15: #{tpu_custom_call.1} parent=1 // pred_check_branch
      %52 = sbr.rel (0) target = $region17
    $region16: #{tpu_custom_call.1} parent=1 // pred_region
      %53 = dma.done [#allocation9], 256
    $region17: #{tpu_custom_call.1} parent=1 // pred_fallthru
      _
    %s54 = sadd.s32 0, 0
    %p55 = scmp.lt.s32.totalorder %s54, 0
    %s56 = scalar_select %p55, %s54, 0
    %s57 = smul.u32 2, %s56
    %s58 = sadd.s32 0, 0
    %p59 = scmp.lt.s32.totalorder %s58, 0
    %s60 = scalar_select %p59, %s58, 0
    %s61 = smul.u32 2, %s60
    %p62 = scmp.eq.s32.totalorder 0, 0
    // Predicated region
    $region18: #{tpu_custom_call.1} parent=1 // pred_check
      %p63 = pneg %p62
    $region19: #{tpu_custom_call.1} parent=1 // pred_check_branch
      %65 = sbr.rel (%p63) target = $region21
    $region20: #{tpu_custom_call.1} parent=1 // pred_region
      %66 = vst [vmem:[#allocation2] sm:$0xff] 0.0
    $region21: #{tpu_custom_call.1} parent=1 // pred_fallthru
      _
    %v67 = vld [vmem:[#allocation5] sm:$0xff]
    %v68 = vld [vmem:[#allocation5 + $0x8] sm:$0xff]
    %v69 = vld [vmem:[#allocation8] sm:$0xff]
    %v70 = vld [vmem:[#allocation8 + $0x8] sm:$0xff]
    %v71 = vand.u32 2147483647, %v67
    %v72 = vand.u32 2147483647, %v68
    %v73 = vsub.f32 0.0, %v71
    %v74 = vsub.f32 0.0, %v72
    %v75 = vmul.f32 %v73, 1.442695
    %v76 = vpow.pop %v75
    %v77 = vmul.f32 %v74, 1.442695
    %v78 = vpow.pop %v77
    %v79 = vadd.f32 %v76, 1.0
    %v80 = vadd.f32 %v78, 1.0
    %v81 = vlog2.pop %v79
    %v82 = vmul.f32 %v81, 0.6931472
    %v83 = vlog2.pop %v80
    %v84 = vmul.f32 %v83, 0.6931472
    %v85 = vsub.f32 0.0, %v67
    %v86 = vsub.f32 0.0, %v68
    %v87 = vmax.f32 %v85, 0.0
    %v88 = vmax.f32 %v86, 0.0
    %v89 = vadd.f32 %v87, %v82
    %v90 = vadd.f32 %v88, %v84
    %v91 = vsub.f32 0.0, %v89
    %v92 = vsub.f32 0.0, %v90
    %v93 = vmax.f32 %v67, 0.0
    %v94 = vmax.f32 %v68, 0.0
    %v95 = vadd.f32 %v93, %v82
    %v96 = vadd.f32 %v94, %v84
    %v97 = vsub.f32 0.0, %v95
    %v98 = vsub.f32 0.0, %v96
    %v99 = vmax.f32 %v91, -100.0
    %v100 = vmax.f32 %v92, -100.0
    %v101 = vmax.f32 %v97, -100.0
    %v102 = vmax.f32 %v98, -100.0
    %v103 = vsub.f32 %v99, %v101
    %v104 = vsub.f32 %v100, %v102
    %v105 = vmul.f32 %v69, %v103
    %v106 = vmul.f32 %v70, %v104
    %v107 = vadd.f32 %v101, %v105
    %v108 = vadd.f32 %v102, %v106
    %v109 = vsub.f32 0.0, %v107
    %v110 = vsub.f32 0.0, %v108
    %s111 = sadd.s32 0, 0
    %s112 = smul.u32 %s111, 2048
    %s113 = sld [smem:[#allocation4]]
    %s114 = sadd.s32 %s112, 2048
    %p115 = scmp.gt.s32.totalorder %s114, %s113
    %p116 = scmp.le.s32.totalorder %s114, %s113
    // Predicated region
    $region22: #{tpu_custom_call.1} parent=1 // pred_check
      %p117 = pneg %p116
    $region23: #{tpu_custom_call.1} parent=1 // pred_check_branch
      %119 = sbr.rel (%p117) target = $region25
    $region24: #{tpu_custom_call.1} parent=1 // pred_region
      %v120 = vld [vmem:[#allocation2] sm:$0xff]
      %v121 = vadd.f32 %v109, %v110
      %v122 = vadd.f32 %v120, %v121
      %123 = vst [vmem:[#allocation2] sm:$0xff] %v122
    $region25: #{tpu_custom_call.1} parent=1 // pred_fallthru
      _
    // Predicated region
    $region26: #{tpu_custom_call.1} parent=1 // pred_check
      %p124 = pneg %p115
    $region27: #{tpu_custom_call.1} parent=1 // pred_check_branch
      %126 = sbr.rel (%p124) target = $region29
    $region28: #{tpu_custom_call.1} parent=1 // pred_region
      %v127 = vlaneseq
      %v128 = vshrl.u32 %v127, 7
      %v129 = vadd.s32 %v128, 8
      %v130 = vlaneseq
      %v131 = vand.u32 %v130, 127
      %v132 = vmul.u32 %v128, 128
      %v133 = vmul.u32 %v129, 128
      %v134 = vstv %s112
      %v135 = vadd.s32 %v134, %v132
      %v136 = vadd.s32 %v134, %v133
      %v137 = vadd.s32 %v135, %v131
      %v138 = vadd.s32 %v136, %v131
      %v139 = vstv %s113
      %vm140 = vcmp.lt.s32.totalorder %v137, %v139
      %vm141 = vcmp.lt.s32.totalorder %v138, %v139
      %v142 = vsel %vm140, %v109, 0.0
      %v143 = vsel %vm141, %v110, 0.0
      %v144 = vld [vmem:[#allocation2] sm:$0xff]
      %v145 = vadd.f32 %v142, %v143
      %v146 = vadd.f32 %v144, %v145
      %147 = vst [vmem:[#allocation2] sm:$0xff] %v146
    $region29: #{tpu_custom_call.1} parent=1 // pred_fallthru
      _
    // Predicated region
    $region30: #{tpu_custom_call.1} parent=1 // pred_check
      %p148 = pneg %p62
    $region31: #{tpu_custom_call.1} parent=1 // pred_check_branch
      %150 = sbr.rel (%p148) target = $region33
    $region32: #{tpu_custom_call.1} parent=1 // pred_region
      %v151 = vld [vmem:[#allocation2] sm:$0xff]
      %152 = vst [vmem:[#allocation10] sm:$0xff] %v151
    $region33: #{tpu_custom_call.1} parent=1 // pred_fallthru
      _
    // Predicated region
    $region34: #{tpu_custom_call.1} parent=1 // pred_check
      _
    $region35: #{tpu_custom_call.1} parent=1 // pred_check_branch
      %154 = sbr.rel (0) target = $region37
    $region36: #{tpu_custom_call.1} parent=1 // pred_region
      %s156 = ssub.s32 128, 128
      %157 = vsyncadd [#allocation7], %s156
      %s159 = sshll.u32 [#allocation10], 4
      %s160 = int_to_ptr.vmem [resolvable:$true] %s159
      %162 = dma.vmem_to_hbm [thread:$0]  %s160, 128, %s3, [#allocation7]
    $region37: #{tpu_custom_call.1} parent=1 // pred_fallthru
      _
    // Predicated region
    $region38: #{tpu_custom_call.1} parent=1 // pred_check
      _
    $region39: #{tpu_custom_call.1} parent=1 // pred_check_branch
      %164 = sbr.rel (0) target = $region41
    $region40: #{tpu_custom_call.1} parent=1 // pred_region
      %165 = dma.done [#allocation7], 128
    $region41: #{tpu_custom_call.1} parent=1 // pred_fallthru
      _
    %166 = vsyncpa [#allocation6], 1
    %167 = vsyncpa [#allocation9], 1
    %168 = vsyncpa [#allocation7], 1

</llo_original>
